<compile_context>
chip_gen: v7x
topology: tpu7x:2x2x1
jax: 0.10.0
libtpu: 0.0.40
codegen_flags: <defaults>
</compile_context>

<pallas_src>
import math

import jax
import jax.numpy as jnp
from jax import lax
from jax.experimental import pallas as pl
from jax.experimental.pallas import tpu as pltpu


def _diffusion_core_kernel(
    x_ref,       # (C, HW)   f32   latent, channels on sublanes, pixels on lanes
    cc_ref,      # (S, D)    f32   concatenated cross-attn context
    w_in_ref,    # (H, C)    bf16  conv_in weight (transposed)
    b_in_ref,    # (H, 1)    f32
    w_xq_ref,    # (H, C)    bf16  fused conv_in@Wq, 1/sqrt(H) scale folded in
    b_q_ref,     # (H, 1)    f32   fused Q bias, scale folded in
    wkv_ref,     # (D, 2H)   bf16  fused K|V projection
    wo_ref,      # (H, H)    bf16  attention output projection (transposed)
    w_out_ref,   # (C, H)    bf16  conv_out weight (transposed)
    b_out_ref,   # (C, 1)    f32
    o_ref,       # (C, HW)   f32
):
    xT = x_ref[...]                                  # (C, HW) f32 (residual)
    x_bf = xT.astype(jnp.bfloat16)
    cc_bf = cc_ref[...].astype(jnp.bfloat16)

    # conv_in (1x1 conv == per-pixel matmul): hT = W_in^T @ xT + b_in
    hT = jnp.dot(w_in_ref[...], x_bf,
                 preferred_element_type=jnp.float32) + b_in_ref[...]

    # Fused query: qT = (W_in @ Wq)^T @ xT + b_q   (scale already folded in)
    qT = jnp.dot(w_xq_ref[...], x_bf,
                 preferred_element_type=jnp.float32) + b_q_ref[...]

    # Fused K|V projection produced directly transposed: (2H, S)
    kvT = lax.dot_general(wkv_ref[...], cc_bf,
                          dimension_numbers=(((0,), (1,)), ((), ())),
                          preferred_element_type=jnp.float32)
    H = w_in_ref.shape[0]
    kT_bf = kvT[:H].astype(jnp.bfloat16)             # (H, S) sublane slice
    vT_bf = kvT[H:].astype(jnp.bfloat16)             # (H, S) sublane slice

    # scoresT[s, x] = sum_h K[s,h] Q[x,h]  -> (S, HW), HW lane-dense
    scoresT = lax.dot_general(kT_bf, qT.astype(jnp.bfloat16),
                              dimension_numbers=(((0,), (0,)), ((), ())),
                              preferred_element_type=jnp.float32)

    # Softmax over the context axis (axis 0), float32 math (v5e-safe).
    m = jnp.max(scoresT, axis=0, keepdims=True)      # (1, HW)
    e = jnp.exp(scoresT - m)
    denom = jnp.sum(e, axis=0, keepdims=True)
    pT = e * pl.reciprocal(denom, approx=True)       # EUP reciprocal

    # attnT = V^T @ P^T : (H, HW)
    attnT = jnp.dot(vT_bf, pT.astype(jnp.bfloat16),
                    preferred_element_type=jnp.float32)

    # attention output projection + residual in hidden space
    hT = jnp.dot(wo_ref[...], attnT.astype(jnp.bfloat16),
                 preferred_element_type=jnp.float32) + hT

    # conv_out (1x1) back to latent channels + residual to the input latent
    outT = (jnp.dot(w_out_ref[...], hT.astype(jnp.bfloat16),
                    preferred_element_type=jnp.float32)
            + b_out_ref[...] + xT)
    o_ref[...] = outT.astype(o_ref.dtype)


def _run_diffusion_core(x_flat, cc, params):
    """x_flat: (B, C, HW) float32, cc: (B, S, D_ctx) float32."""
    B, C, HW = x_flat.shape
    _, S, D = cc.shape

    def full_spec(arr):
        # Constant index_map: block identical for every grid step, so these
        # small weight tiles stay resident in VMEM (no per-batch re-DMA).
        return pl.BlockSpec(arr.shape, lambda b: (0, 0))

    return pl.pallas_call(
        _diffusion_core_kernel,
        out_shape=jax.ShapeDtypeStruct((B, C, HW), jnp.float32),
        grid=(B,),
        in_specs=[
            pl.BlockSpec((pl.Squeezed(), C, HW), lambda b: (b, 0, 0)),
            pl.BlockSpec((pl.Squeezed(), S, D), lambda b: (b, 0, 0)),
            full_spec(params["w_inT"]),
            full_spec(params["b_inT"]),
            full_spec(params["w_xqT"]),
            full_spec(params["b_qT"]),
            full_spec(params["wkv"]),
            full_spec(params["woT"]),
            full_spec(params["w_outT"]),
            full_spec(params["b_outT"]),
        ],
        out_specs=pl.BlockSpec((pl.Squeezed(), C, HW), lambda b: (b, 0, 0)),
        compiler_params=pltpu.CompilerParams(
            dimension_semantics=("parallel",)),   # v7x: 2 TCs split the batch
    )(
        x_flat, cc,
        params["w_inT"], params["b_inT"], params["w_xqT"], params["b_qT"],
        params["wkv"], params["woT"], params["w_outT"], params["b_outT"],
    )


def _reference_core(x_flat, cc, params):
    """Pure-JAX reference of the surrogate core (f32 math, same fused weights)."""
    w_inT = params["w_inT"].astype(jnp.float32)
    w_xqT = params["w_xqT"].astype(jnp.float32)
    wkv = params["wkv"].astype(jnp.float32)
    woT = params["woT"].astype(jnp.float32)
    w_outT = params["w_outT"].astype(jnp.float32)
    H = w_inT.shape[0]

    h = jnp.einsum("hc,bcx->bhx", w_inT, x_flat) + params["b_inT"][None]
    q = jnp.einsum("hc,bcx->bhx", w_xqT, x_flat) + params["b_qT"][None]
    kv = jnp.einsum("dk,bsd->bks", wkv, cc)          # (B, 2H, S)
    k, v = kv[:, :H], kv[:, H:]
    scores = jnp.einsum("bhs,bhx->bsx", k, q)
    p = jax.nn.softmax(scores, axis=1)
    attn = jnp.einsum("bhs,bsx->bhx", v, p)
    h = jnp.einsum("ij,bjx->bix", woT, attn) + h
    return (jnp.einsum("ch,bhx->bcx", w_outT, h)
            + params["b_outT"][None] + x_flat)


class DiffusionWrapperPallas:
    """JAX/Pallas port of DiffusionWrapper (w/o time embedding)."""

    def __init__(self, latent_ch, conditioning_key=None, hidden=64,
                 cross_attention_dim=64):
        assert conditioning_key in [None, "concat", "crossattn", "hybrid", "adm"]
        self.latent_ch = latent_ch
        self.conditioning_key = conditioning_key
        self.hidden = hidden
        self.cross_attention_dim = cross_attention_dim

        # Deterministic synthetic parameters (surrogate UNet core).
        key = jax.random.PRNGKey(0)
        ks = jax.random.split(key, 6)
        C, Hd, Dc = latent_ch, hidden, cross_attention_dim
        s = lambda fan_in: 1.0 / math.sqrt(fan_in)
        w_in = jax.random.normal(ks[0], (C, Hd), jnp.float32) * s(C)
        b_in = jnp.zeros((Hd,), jnp.float32)
        wq = jax.random.normal(ks[1], (Hd, Hd), jnp.float32) * s(Hd)
        wk = jax.random.normal(ks[2], (Dc, Hd), jnp.float32) * s(Dc)
        wv = jax.random.normal(ks[3], (Dc, Hd), jnp.float32) * s(Dc)
        wo = jax.random.normal(ks[4], (Hd, Hd), jnp.float32) * s(Hd)
        w_out = jax.random.normal(ks[5], (Hd, C), jnp.float32) * s(Hd)
        b_out = jnp.zeros((C,), jnp.float32)

        # Host-side fusions: conv_in folded into Q (with 1/sqrt(H) scale),
        # K|V concatenated, everything pre-transposed for the (C, HW) layout.
        scale = 1.0 / math.sqrt(Hd)
        w_xq = (w_in @ wq) * scale                    # (C, Hd)
        b_q = (b_in @ wq) * scale                     # (Hd,)
        wkv = jnp.concatenate([wk, wv], axis=1)       # (Dc, 2*Hd)

        self.params = {
            "w_inT":  jnp.asarray(w_in.T, jnp.bfloat16),     # (Hd, C)
            "b_inT":  b_in.reshape(Hd, 1),                   # (Hd, 1) f32
            "w_xqT":  jnp.asarray(w_xq.T, jnp.bfloat16),     # (Hd, C)
            "b_qT":   b_q.reshape(Hd, 1),                    # (Hd, 1) f32
            "wkv":    jnp.asarray(wkv, jnp.bfloat16),        # (Dc, 2Hd)
            "woT":    jnp.asarray(wo.T, jnp.bfloat16),       # (Hd, Hd)
            "w_outT": jnp.asarray(w_out.T, jnp.bfloat16),    # (C, Hd)
            "b_outT": b_out.reshape(C, 1),                   # (C, 1) f32
        }

    def _diffusion_model(self, x_nchw, t, context):
        # TODO(synk): timestep `t` is accepted but unused — this is the
        # "w_o_time_emb" (without time embedding) variant of the model.
        del t
        B, C, Himg, Wimg = x_nchw.shape
        # NCHW -> (B, C, H*W): a free reshape, no transpose (lane-dense HW).
        x_flat = x_nchw.reshape(B, C, Himg * Wimg)
        out_flat = _run_diffusion_core(x_flat, context, self.params)
        return out_flat.reshape(B, C, Himg, Wimg)

    def forward(self, x, t, c_concat=None, c_crossattn=None):
        if self.conditioning_key is None:
            # No conditioning: run with a zero context.
            B = x.shape[0]
            cc = jnp.zeros((B, 1, self.cross_attention_dim), jnp.float32)
            return self._diffusion_model(x, t, cc)
        elif self.conditioning_key == "crossattn":
            cc = jnp.concatenate(c_crossattn, axis=1)  # concat along seq dim (dim=1)
            return self._diffusion_model(x, t, cc)
        else:
            # TODO(synk): 'concat' / 'hybrid' / 'adm' paths would change the
            # surrogate model's input channels / class conditioning; not wired.
            raise NotImplementedError(self.conditioning_key)

    __call__ = forward


if __name__ == "__main__":
    B, C, Himg, Wimg = 2, 4, 16, 16
    seq, Dc = 8, 64

    key = jax.random.PRNGKey(0)
    kx, kc1, kc2 = jax.random.split(key, 3)
    x = jax.random.normal(kx, (B, C, Himg, Wimg), jnp.float32)
    t = jnp.zeros((B,), jnp.int32)
    c_crossattn = [
        jax.random.normal(kc1, (B, seq, Dc), jnp.float32),
        jax.random.normal(kc2, (B, seq, Dc), jnp.float32),
    ]

    model = DiffusionWrapperPallas(latent_ch=C, conditioning_key="crossattn",
                                   hidden=64, cross_attention_dim=Dc)
    out = model(x, t, c_crossattn=c_crossattn)
    out = jax.block_until_ready(out)
    assert out.shape == (B, C, Himg, Wimg), out.shape
    assert jnp.all(jnp.isfinite(out))

    # Correctness check against a pure-JAX f32 reference (loose tolerance:
    # bf16 MXU operands + approx reciprocal in the kernel).
    cc_full = jnp.concatenate(c_crossattn, axis=1)
    ref = _reference_core(x.reshape(B, C, Himg * Wimg), cc_full, model.params)
    ref = ref.reshape(B, C, Himg, Wimg)
    assert jnp.allclose(out, ref, rtol=3e-2, atol=3e-2), (
        float(jnp.max(jnp.abs(out - ref))))

    print("KERNEL_OK")
</pallas_src>

<mosaic_0001>
module attributes {stable_mosaic.version = 11 : i64} {
  func.func @_diffusion_core_kernel(%arg0: i32, %arg1: memref<1x4x256xf32, #tpu.memory_space<vmem>>, %arg2: memref<1x16x64xf32, #tpu.memory_space<vmem>>, %arg3: memref<64x4xbf16, #tpu.memory_space<vmem>>, %arg4: memref<64x1xf32, #tpu.memory_space<vmem>>, %arg5: memref<64x4xbf16, #tpu.memory_space<vmem>>, %arg6: memref<64x1xf32, #tpu.memory_space<vmem>>, %arg7: memref<64x128xbf16, #tpu.memory_space<vmem>>, %arg8: memref<64x64xbf16, #tpu.memory_space<vmem>>, %arg9: memref<4x64xbf16, #tpu.memory_space<vmem>>, %arg10: memref<4x1xf32, #tpu.memory_space<vmem>>, %arg11: memref<1x4x256xf32, #tpu.memory_space<vmem>>) attributes {dimension_semantics = [#tpu.dimension_semantics<parallel>], iteration_bounds = array<i64: 2>, scalar_prefetch = 0 : i64, scratch_operands = 0 : i64, tpu.core_type = #tpu.core_type<tc>, window_params = [{transform_indices = @transform_0, window_bounds = array<i64: 1, 4, 256>}, {transform_indices = @transform_1, window_bounds = array<i64: 1, 16, 64>}, {pipeline_mode = #tpu.pipeline_mode<synchronous>, transform_indices = @transform_2, window_bounds = array<i64: 64, 4>}, {pipeline_mode = #tpu.pipeline_mode<synchronous>, transform_indices = @transform_3, window_bounds = array<i64: 64, 1>}, {pipeline_mode = #tpu.pipeline_mode<synchronous>, transform_indices = @transform_4, window_bounds = array<i64: 64, 4>}, {pipeline_mode = #tpu.pipeline_mode<synchronous>, transform_indices = @transform_5, window_bounds = array<i64: 64, 1>}, {pipeline_mode = #tpu.pipeline_mode<synchronous>, transform_indices = @transform_6, window_bounds = array<i64: 64, 128>}, {pipeline_mode = #tpu.pipeline_mode<synchronous>, transform_indices = @transform_7, window_bounds = array<i64: 64, 64>}, {pipeline_mode = #tpu.pipeline_mode<synchronous>, transform_indices = @transform_8, window_bounds = array<i64: 4, 64>}, {pipeline_mode = #tpu.pipeline_mode<synchronous>, transform_indices = @transform_9, window_bounds = array<i64: 4, 1>}, {transform_indices = @transform_10, window_bounds = array<i64: 1, 4, 256>}]} {
    %c0 = arith.constant 0 : index
    %c0_0 = arith.constant 0 : index
    %c0_1 = arith.constant 0 : index
    %0 = vector.load %arg1[%c0, %c0_0, %c0_1] : memref<1x4x256xf32, #tpu.memory_space<vmem>>, vector<1x4x256xf32>
    %1 = vector.shape_cast %0 : vector<1x4x256xf32> to vector<4x256xf32>
    %2 = arith.truncf %1 : vector<4x256xf32> to vector<4x256xbf16>
    %c0_2 = arith.constant 0 : index
    %c0_3 = arith.constant 0 : index
    %c0_4 = arith.constant 0 : index
    %3 = vector.load %arg2[%c0_2, %c0_3, %c0_4] : memref<1x16x64xf32, #tpu.memory_space<vmem>>, vector<1x16x64xf32>
    %4 = vector.shape_cast %3 : vector<1x16x64xf32> to vector<16x64xf32>
    %5 = arith.truncf %4 : vector<16x64xf32> to vector<16x64xbf16>
    %c0_5 = arith.constant 0 : index
    %c0_6 = arith.constant 0 : index
    %6 = vector.load %arg3[%c0_5, %c0_6] : memref<64x4xbf16, #tpu.memory_space<vmem>>, vector<64x4xbf16>
    %cst = arith.constant dense<0.000000e+00> : vector<64x256xf32>
    %7 = tpu.matmul %6, %2, %cst {dimension_numbers = #tpu.dot_dimension_numbers<[1], [0], [0], [1], [0, 0, 1, 1], [], []>} : vector<64x4xbf16>, vector<4x256xbf16>, vector<64x256xf32> -> vector<64x256xf32>
    %c0_7 = arith.constant 0 : index
    %c0_8 = arith.constant 0 : index
    %8 = vector.load %arg4[%c0_7, %c0_8] : memref<64x1xf32, #tpu.memory_space<vmem>>, vector<64x1xf32>
    %9 = vector.broadcast %8 : vector<64x1xf32> to vector<64x256xf32>
    %10 = arith.addf %7, %9 : vector<64x256xf32>
    %c0_9 = arith.constant 0 : index
    %c0_10 = arith.constant 0 : index
    %11 = vector.load %arg5[%c0_9, %c0_10] : memref<64x4xbf16, #tpu.memory_space<vmem>>, vector<64x4xbf16>
    %cst_11 = arith.constant dense<0.000000e+00> : vector<64x256xf32>
    %12 = tpu.matmul %11, %2, %cst_11 {dimension_numbers = #tpu.dot_dimension_numbers<[1], [0], [0], [1], [0, 0, 1, 1], [], []>} : vector<64x4xbf16>, vector<4x256xbf16>, vector<64x256xf32> -> vector<64x256xf32>
    %c0_12 = arith.constant 0 : index
    %c0_13 = arith.constant 0 : index
    %13 = vector.load %arg6[%c0_12, %c0_13] : memref<64x1xf32, #tpu.memory_space<vmem>>, vector<64x1xf32>
    %14 = vector.broadcast %13 : vector<64x1xf32> to vector<64x256xf32>
    %15 = arith.addf %12, %14 : vector<64x256xf32>
    %c0_14 = arith.constant 0 : index
    %c0_15 = arith.constant 0 : index
    %16 = vector.load %arg7[%c0_14, %c0_15] : memref<64x128xbf16, #tpu.memory_space<vmem>>, vector<64x128xbf16>
    %cst_16 = arith.constant dense<0.000000e+00> : vector<128x16xf32>
    %17 = tpu.matmul %16, %5, %cst_16 {dimension_numbers = #tpu.dot_dimension_numbers<[0], [1], [1], [0], [0, 1, 1, 0], [], []>} : vector<64x128xbf16>, vector<16x64xbf16>, vector<128x16xf32> -> vector<128x16xf32>
    %18 = vector.extract_strided_slice %17 {offsets = [0, 0], sizes = [64, 16], strides = [1, 1]} : vector<128x16xf32> to vector<64x16xf32>
    %19 = arith.truncf %18 : vector<64x16xf32> to vector<64x16xbf16>
    %20 = vector.extract_strided_slice %17 {offsets = [64, 0], sizes = [64, 16], strides = [1, 1]} : vector<128x16xf32> to vector<64x16xf32>
    %21 = arith.truncf %20 : vector<64x16xf32> to vector<64x16xbf16>
    %22 = arith.truncf %15 : vector<64x256xf32> to vector<64x256xbf16>
    %cst_17 = arith.constant dense<0.000000e+00> : vector<16x256xf32>
    %23 = tpu.matmul %19, %22, %cst_17 {dimension_numbers = #tpu.dot_dimension_numbers<[0], [0], [1], [1], [0, 1, 1, 1], [], []>} : vector<64x16xbf16>, vector<64x256xbf16>, vector<16x256xf32> -> vector<16x256xf32>
    %cst_18 = arith.constant dense<0xFF800000> : vector<256xf32>
    %24 = vector.multi_reduction <maximumf>, %23, %cst_18 [0] : vector<16x256xf32> to vector<256xf32>
    %25 = vector.shape_cast %24 : vector<256xf32> to vector<1x256xf32>
    %26 = vector.broadcast %25 : vector<1x256xf32> to vector<16x256xf32>
    %27 = arith.subf %23, %26 : vector<16x256xf32>
    %28 = math.exp %27 : vector<16x256xf32>
    %cst_19 = arith.constant dense<0.000000e+00> : vector<256xf32>
    %29 = vector.multi_reduction <add>, %28, %cst_19 [0] : vector<16x256xf32> to vector<256xf32>
    %30 = vector.shape_cast %29 : vector<256xf32> to vector<1x256xf32>
    %31 = tpu.reciprocal %30 {approx = true} : vector<1x256xf32> -> vector<1x256xf32>
    %32 = vector.broadcast %31 : vector<1x256xf32> to vector<16x256xf32>
    %33 = arith.mulf %28, %32 : vector<16x256xf32>
    %34 = arith.truncf %33 : vector<16x256xf32> to vector<16x256xbf16>
    %cst_20 = arith.constant dense<0.000000e+00> : vector<64x256xf32>
    %35 = tpu.matmul %21, %34, %cst_20 {dimension_numbers = #tpu.dot_dimension_numbers<[1], [0], [0], [1], [0, 0, 1, 1], [], []>} : vector<64x16xbf16>, vector<16x256xbf16>, vector<64x256xf32> -> vector<64x256xf32>
    %c0_21 = arith.constant 0 : index
    %c0_22 = arith.constant 0 : index
    %36 = vector.load %arg8[%c0_21, %c0_22] : memref<64x64xbf16, #tpu.memory_space<vmem>>, vector<64x64xbf16>
    %37 = arith.truncf %35 : vector<64x256xf32> to vector<64x256xbf16>
    %cst_23 = arith.constant dense<0.000000e+00> : vector<64x256xf32>
    %38 = tpu.matmul %36, %37, %cst_23 {dimension_numbers = #tpu.dot_dimension_numbers<[1], [0], [0], [1], [0, 0, 1, 1], [], []>} : vector<64x64xbf16>, vector<64x256xbf16>, vector<64x256xf32> -> vector<64x256xf32>
    %39 = arith.addf %38, %10 : vector<64x256xf32>
    %c0_24 = arith.constant 0 : index
    %c0_25 = arith.constant 0 : index
    %40 = vector.load %arg9[%c0_24, %c0_25] : memref<4x64xbf16, #tpu.memory_space<vmem>>, vector<4x64xbf16>
    %41 = arith.truncf %39 : vector<64x256xf32> to vector<64x256xbf16>
    %cst_26 = arith.constant dense<0.000000e+00> : vector<4x256xf32>
    %42 = tpu.matmul %40, %41, %cst_26 {dimension_numbers = #tpu.dot_dimension_numbers<[1], [0], [0], [1], [0, 0, 1, 1], [], []>} : vector<4x64xbf16>, vector<64x256xbf16>, vector<4x256xf32> -> vector<4x256xf32>
    %c0_27 = arith.constant 0 : index
    %c0_28 = arith.constant 0 : index
    %43 = vector.load %arg10[%c0_27, %c0_28] : memref<4x1xf32, #tpu.memory_space<vmem>>, vector<4x1xf32>
    %44 = vector.broadcast %43 : vector<4x1xf32> to vector<4x256xf32>
    %45 = arith.addf %42, %44 : vector<4x256xf32>
    %46 = arith.addf %45, %1 : vector<4x256xf32>
    %c0_29 = arith.constant 0 : index
    %c0_30 = arith.constant 0 : index
    %c0_31 = arith.constant 0 : index
    %47 = vector.load %arg11[%c0_29, %c0_30, %c0_31] : memref<1x4x256xf32, #tpu.memory_space<vmem>>, vector<1x4x256xf32>
    %48 = vector.shape_cast %47 : vector<1x4x256xf32> to vector<4x256xf32>
    %49 = vector.shape_cast %46 : vector<4x256xf32> to vector<1x4x256xf32>
    tpu.vector_store %arg11[%c0_29, %c0_30, %c0_31], %49 {strides = array<i32>} : memref<1x4x256xf32, #tpu.memory_space<vmem>>, vector<1x4x256xf32>,
    return
  }
  func.func @transform_0(%arg0: i32) -> (i32, i32, i32) {
    %c0_i32 = arith.constant 0 : i32
    %c0_i32_0 = arith.constant 0 : i32
    %c0_i32_1 = arith.constant 0 : i32
    return %arg0, %c0_i32, %c0_i32_0 : i32, i32, i32
  }
  func.func @transform_1(%arg0: i32) -> (i32, i32, i32) {
    %c0_i32 = arith.constant 0 : i32
    %c0_i32_0 = arith.constant 0 : i32
    %c0_i32_1 = arith.constant 0 : i32
    return %arg0, %c0_i32, %c0_i32_0 : i32, i32, i32
  }
  func.func @transform_2(%arg0: i32) -> (i32, i32) {
    %c0_i32 = arith.constant 0 : i32
    %c0_i32_0 = arith.constant 0 : i32
    %c0_i32_1 = arith.constant 0 : i32
    return %c0_i32, %c0_i32_0 : i32, i32
  }
  func.func @transform_3(%arg0: i32) -> (i32, i32) {
    %c0_i32 = arith.constant 0 : i32
    %c0_i32_0 = arith.constant 0 : i32
    %c0_i32_1 = arith.constant 0 : i32
    return %c0_i32, %c0_i32_0 : i32, i32
  }
  func.func @transform_4(%arg0: i32) -> (i32, i32) {
    %c0_i32 = arith.constant 0 : i32
    %c0_i32_0 = arith.constant 0 : i32
    %c0_i32_1 = arith.constant 0 : i32
    return %c0_i32, %c0_i32_0 : i32, i32
  }
  func.func @transform_5(%arg0: i32) -> (i32, i32) {
    %c0_i32 = arith.constant 0 : i32
    %c0_i32_0 = arith.constant 0 : i32
    %c0_i32_1 = arith.constant 0 : i32
    return %c0_i32, %c0_i32_0 : i32, i32
  }
  func.func @transform_6(%arg0: i32) -> (i32, i32) {
    %c0_i32 = arith.constant 0 : i32
    %c0_i32_0 = arith.constant 0 : i32
    %c0_i32_1 = arith.constant 0 : i32
    return %c0_i32, %c0_i32_0 : i32, i32
  }
  func.func @transform_7(%arg0: i32) -> (i32, i32) {
    %c0_i32 = arith.constant 0 : i32
    %c0_i32_0 = arith.constant 0 : i32
    %c0_i32_1 = arith.constant 0 : i32
    return %c0_i32, %c0_i32_0 : i32, i32
  }
  func.func @transform_8(%arg0: i32) -> (i32, i32) {
    %c0_i32 = arith.constant 0 : i32
    %c0_i32_0 = arith.constant 0 : i32
    %c0_i32_1 = arith.constant 0 : i32
    return %c0_i32, %c0_i32_0 : i32, i32
  }
  func.func @transform_9(%arg0: i32) -> (i32, i32) {
    %c0_i32 = arith.constant 0 : i32
    %c0_i32_0 = arith.constant 0 : i32
    %c0_i32_1 = arith.constant 0 : i32
    return %c0_i32, %c0_i32_0 : i32, i32
  }
  func.func @transform_10(%arg0: i32) -> (i32, i32, i32) {
    %c0_i32 = arith.constant 0 : i32
    %c0_i32_0 = arith.constant 0 : i32
    %c0_i32_1 = arith.constant 0 : i32
    return %arg0, %c0_i32, %c0_i32_0 : i32, i32, i32
  }
}

</mosaic_0001>

<llo_original>
// kernel: tpu_custom_call.1
$region0: #{tpu_custom_call.1}
  #allocation0 [shape = 'u32[]', space=smem, size = 0x4, offset = 0x4, fixed_abs, tag = 'smem constant byte address 0x4 - core index']
  #allocation1 [shape = 'u32[144,128]{1,0:T(1,128)}', space=vmem, size = 0x12000, scoped, tag = 'internal scratch']
  %s0 = inlined_call_operand.vmem [shape: f32[2,4,256], index: 0, kind: input, shape index: {}]
  %s1 = inlined_call_operand.vmem [shape: f32[2,16,64], index: 1, kind: input, shape index: {}]
  %s2 = inlined_call_operand.vmem [shape: bf16[64,4], index: 2, kind: input, shape index: {}]
  %s3 = inlined_call_operand.vmem [shape: f32[64,1], index: 3, kind: input, shape index: {}]
  %s4 = inlined_call_operand.vmem [shape: bf16[64,4], index: 4, kind: input, shape index: {}]
  %s5 = inlined_call_operand.vmem [shape: f32[64,1], index: 5, kind: input, shape index: {}]
  %s6 = inlined_call_operand.vmem [shape: bf16[64,128], index: 6, kind: input, shape index: {}]
  %s7 = inlined_call_operand.vmem [shape: bf16[64,64], index: 7, kind: input, shape index: {}]
  %s8 = inlined_call_operand.vmem [shape: bf16[4,64], index: 8, kind: input, shape index: {}]
  %s9 = inlined_call_operand.vmem [shape: f32[4,1], index: 9, kind: input, shape index: {}]
  %s10 = inlined_call_operand.hbm [shape: f32[2,4,256], index: 10, kind: output, shape index: {}]
  %s11 = sld [smem:[#allocation0]]
  $region73: #{tpu_custom_call.1} parent=0
    _
  %s13 = ssub.s32 1, %s11
  %s14 = scalar_select 0, %s13, %s11
  $region1: #{tpu_custom_call.1} parent=0
    #allocation2 [shape = 'u8[8192]{0}', space=vmem, size = 0x2000, scoped, tag = 'output window, operand 0']
    #allocation3 [shape = 's32[2]{0}', space=sflag, size = 0x8, scoped, tag = 'scoped memory for tpu_custom_call.1']
    %15 = vsyncpa [#allocation3], 0
    %s16 = scalar_lea.sflag [#allocation3], 1
    %17 = vsyncpa %s16, 0
    loop: start=0, step=1, limit=4
    $region2: #{tpu_custom_call.1} parent=1 // loop_pre_header
      _
    $region3: #{tpu_custom_call.1} parent=1 // loop_header
      %s19 = sphi 0, %s23
      %p20 = scmp.ge.s32.totalorder %s19, 4
      %s29 = sphi 0, %s31
      %s32 = sphi 0, %s29
      %s33 = sphi 0, %s32
      %s49 = sphi 0, %s33
      %s55 = sphi 0, %s57
      %s58 = sphi 0, %s55
      %s59 = sphi 0, %s58
      %s75 = sphi 0, %s59
      %s79 = sphi 0, %s79
      %s81 = sphi 0, %s79
      %s82 = sphi 0, %s81
      %s96 = sphi 0, %s82
      %s100 = sphi 0, %s100
      %s102 = sphi 0, %s100
      %s103 = sphi 0, %s102
      %s117 = sphi 0, %s103
      %s121 = sphi 0, %s121
      %s123 = sphi 0, %s121
      %s124 = sphi 0, %s123
      %s138 = sphi 0, %s124
      %s142 = sphi 0, %s142
      %s144 = sphi 0, %s142
      %s145 = sphi 0, %s144
      %s159 = sphi 0, %s145
      %s163 = sphi 0, %s163
      %s165 = sphi 0, %s163
      %s166 = sphi 0, %s165
      %s180 = sphi 0, %s166
      %s184 = sphi 0, %s184
      %s186 = sphi 0, %s184
      %s187 = sphi 0, %s186
      %s201 = sphi 0, %s187
      %s205 = sphi 0, %s205
      %s207 = sphi 0, %s205
      %s208 = sphi 0, %s207
      %s222 = sphi 0, %s208
      %s226 = sphi 0, %s226
      %s228 = sphi 0, %s226
      %s229 = sphi 0, %s228
      %s243 = sphi 0, %s229
      %s249 = sphi 0, %s251
      %s252 = sphi 0, %s249
      %s253 = sphi 0, %s252
      %s269 = sphi 0, %s253
    $region4: #{tpu_custom_call.1} parent=1 // loop_header_branch
      %22 = sbr.rel (%p20) target = $region8
    $region5: #{tpu_custom_call.1} parent=1 // loop_body
      %s24 = ssub.s32 %s19, 1
      %s25 = ssub.s32 %s19, 2
      %s26 = sadd.s32 %s19, 1
      %s27 = ssub.s32 %s19, %s26
      %p28 = scmp.eq.s32.totalorder %s27, 0
      %s30 = sadd.s32 %s29, 1
      %s31 = scalar_select %p28, %s29, %s30
      %p34 = pneg %p28
      %p35 = scmp.eq.s32.totalorder %s19, 1
      %p36 = por %p34, %p35
      %p37 = scmp.ne.s32.totalorder %s29, %s32
      %p38 = scmp.eq.s32.totalorder %s19, 0
      %p39 = por %p37, %p38
      %p40 = scmp.ne.s32.totalorder %s29, %s32
      %p41 = scmp.eq.s32.totalorder %s24, 1
      %p42 = por %p40, %p41
      %p43 = scmp.ne.s32.totalorder %s32, %s33
      %p44 = scmp.eq.s32.totalorder %s24, 0
      %p45 = por %p43, %p44
      %p46 = scmp.ne.s32.totalorder %s32, %s33
      %p47 = scmp.eq.s32.totalorder %s25, 1
      %p48 = por %p46, %p47
      %p50 = scmp.ne.s32.totalorder %s33, %s49
      %p51 = scmp.eq.s32.totalorder %s25, 0
      %p52 = por %p50, %p51
      %s53 = ssub.s32 %s19, %s26
      %p54 = scmp.eq.s32.totalorder %s53, 0
      %s56 = sadd.s32 %s55, 1
      %s57 = scalar_select %p54, %s55, %s56
      %p60 = pneg %p54
      %p61 = scmp.eq.s32.totalorder %s19, 1
      %p62 = por %p60, %p61
      %p63 = scmp.ne.s32.totalorder %s55, %s58
      %p64 = scmp.eq.s32.totalorder %s19, 0
      %p65 = por %p63, %p64
      %p66 = scmp.ne.s32.totalorder %s55, %s58
      %p67 = scmp.eq.s32.totalorder %s24, 1
      %p68 = por %p66, %p67
      %p69 = scmp.ne.s32.totalorder %s58, %s59
      %p70 = scmp.eq.s32.totalorder %s24, 0
      %p71 = por %p69, %p70
      %p72 = scmp.ne.s32.totalorder %s58, %s59
      %p73 = scmp.eq.s32.totalorder %s25, 1
      %p74 = por %p72, %p73
      %p76 = scmp.ne.s32.totalorder %s59, %s75
      %p77 = scmp.eq.s32.totalorder %s25, 0
      %p78 = por %p76, %p77
      %s80 = sadd.s32 %s79, 1
      %p83 = scmp.eq.s32.totalorder %s19, 1
      %p84 = scmp.ne.s32.totalorder %s79, %s81
      %p85 = scmp.eq.s32.totalorder %s19, 0
      %p86 = por %p84, %p85
      %p87 = scmp.ne.s32.totalorder %s79, %s81
      %p88 = scmp.eq.s32.totalorder %s24, 1
      %p89 = por %p87, %p88
      %p90 = scmp.ne.s32.totalorder %s81, %s82
      %p91 = scmp.eq.s32.totalorder %s24, 0
      %p92 = por %p90, %p91
      %p93 = scmp.ne.s32.totalorder %s81, %s82
      %p94 = scmp.eq.s32.totalorder %s25, 1
      %p95 = por %p93, %p94
      %p97 = scmp.ne.s32.totalorder %s82, %s96
      %p98 = scmp.eq.s32.totalorder %s25, 0
      %p99 = por %p97, %p98
      %s101 = sadd.s32 %s100, 1
      %p104 = scmp.eq.s32.totalorder %s19, 1
      %p105 = scmp.ne.s32.totalorder %s100, %s102
      %p106 = scmp.eq.s32.totalorder %s19, 0
      %p107 = por %p105, %p106
      %p108 = scmp.ne.s32.totalorder %s100, %s102
      %p109 = scmp.eq.s32.totalorder %s24, 1
      %p110 = por %p108, %p109
      %p111 = scmp.ne.s32.totalorder %s102, %s103
      %p112 = scmp.eq.s32.totalorder %s24, 0
      %p113 = por %p111, %p112
      %p114 = scmp.ne.s32.totalorder %s102, %s103
      %p115 = scmp.eq.s32.totalorder %s25, 1
      %p116 = por %p114, %p115
      %p118 = scmp.ne.s32.totalorder %s103, %s117
      %p119 = scmp.eq.s32.totalorder %s25, 0
      %p120 = por %p118, %p119
      %s122 = sadd.s32 %s121, 1
      %p125 = scmp.eq.s32.totalorder %s19, 1
      %p126 = scmp.ne.s32.totalorder %s121, %s123
      %p127 = scmp.eq.s32.totalorder %s19, 0
      %p128 = por %p126, %p127
      %p129 = scmp.ne.s32.totalorder %s121, %s123
      %p130 = scmp.eq.s32.totalorder %s24, 1
      %p131 = por %p129, %p130
      %p132 = scmp.ne.s32.totalorder %s123, %s124
      %p133 = scmp.eq.s32.totalorder %s24, 0
      %p134 = por %p132, %p133
      %p135 = scmp.ne.s32.totalorder %s123, %s124
      %p136 = scmp.eq.s32.totalorder %s25, 1
      %p137 = por %p135, %p136
      %p139 = scmp.ne.s32.totalorder %s124, %s138
      %p140 = scmp.eq.s32.totalorder %s25, 0
      %p141 = por %p139, %p140
      %s143 = sadd.s32 %s142, 1
      %p146 = scmp.eq.s32.totalorder %s19, 1
      %p147 = scmp.ne.s32.totalorder %s142, %s144
      %p148 = scmp.eq.s32.totalorder %s19, 0
      %p149 = por %p147, %p148
      %p150 = scmp.ne.s32.totalorder %s142, %s144
      %p151 = scmp.eq.s32.totalorder %s24, 1
      %p152 = por %p150, %p151
      %p153 = scmp.ne.s32.totalorder %s144, %s145
      %p154 = scmp.eq.s32.totalorder %s24, 0
      %p155 = por %p153, %p154
      %p156 = scmp.ne.s32.totalorder %s144, %s145
      %p157 = scmp.eq.s32.totalorder %s25, 1
      %p158 = por %p156, %p157
      %p160 = scmp.ne.s32.totalorder %s145, %s159
      %p161 = scmp.eq.s32.totalorder %s25, 0
      %p162 = por %p160, %p161
      %s164 = sadd.s32 %s163, 1
      %p167 = scmp.eq.s32.totalorder %s19, 1
      %p168 = scmp.ne.s32.totalorder %s163, %s165
      %p169 = scmp.eq.s32.totalorder %s19, 0
      %p170 = por %p168, %p169
      %p171 = scmp.ne.s32.totalorder %s163, %s165
      %p172 = scmp.eq.s32.totalorder %s24, 1
      %p173 = por %p171, %p172
      %p174 = scmp.ne.s32.totalorder %s165, %s166
      %p175 = scmp.eq.s32.totalorder %s24, 0
      %p176 = por %p174, %p175
      %p177 = scmp.ne.s32.totalorder %s165, %s166
      %p178 = scmp.eq.s32.totalorder %s25, 1
      %p179 = por %p177, %p178
      %p181 = scmp.ne.s32.totalorder %s166, %s180
      %p182 = scmp.eq.s32.totalorder %s25, 0
      %p183 = por %p181, %p182
      %s185 = sadd.s32 %s184, 1
      %p188 = scmp.eq.s32.totalorder %s19, 1
      %p189 = scmp.ne.s32.totalorder %s184, %s186
      %p190 = scmp.eq.s32.totalorder %s19, 0
      %p191 = por %p189, %p190
      %p192 = scmp.ne.s32.totalorder %s184, %s186
      %p193 = scmp.eq.s32.totalorder %s24, 1
      %p194 = por %p192, %p193
      %p195 = scmp.ne.s32.totalorder %s186, %s187
      %p196 = scmp.eq.s32.totalorder %s24, 0
      %p197 = por %p195, %p196
      %p198 = scmp.ne.s32.totalorder %s186, %s187
      %p199 = scmp.eq.s32.totalorder %s25, 1
      %p200 = por %p198, %p199
      %p202 = scmp.ne.s32.totalorder %s187, %s201
      %p203 = scmp.eq.s32.totalorder %s25, 0
      %p204 = por %p202, %p203
      %s206 = sadd.s32 %s205, 1
      %p209 = scmp.eq.s32.totalorder %s19, 1
      %p210 = scmp.ne.s32.totalorder %s205, %s207
      %p211 = scmp.eq.s32.totalorder %s19, 0
      %p212 = por %p210, %p211
      %p213 = scmp.ne.s32.totalorder %s205, %s207
      %p214 = scmp.eq.s32.totalorder %s24, 1
      %p215 = por %p213, %p214
      %p216 = scmp.ne.s32.totalorder %s207, %s208
      %p217 = scmp.eq.s32.totalorder %s24, 0
      %p218 = por %p216, %p217
      %p219 = scmp.ne.s32.totalorder %s207, %s208
      %p220 = scmp.eq.s32.totalorder %s25, 1
      %p221 = por %p219, %p220
      %p223 = scmp.ne.s32.totalorder %s208, %s222
      %p224 = scmp.eq.s32.totalorder %s25, 0
      %p225 = por %p223, %p224
      %s227 = sadd.s32 %s226, 1
      %p230 = scmp.eq.s32.totalorder %s19, 1
      %p231 = scmp.ne.s32.totalorder %s226, %s228
      %p232 = scmp.eq.s32.totalorder %s19, 0
      %p233 = por %p231, %p232
      %p234 = scmp.ne.s32.totalorder %s226, %s228
      %p235 = scmp.eq.s32.totalorder %s24, 1
      %p236 = por %p234, %p235
      %p237 = scmp.ne.s32.totalorder %s228, %s229
      %p238 = scmp.eq.s32.totalorder %s24, 0
      %p239 = por %p237, %p238
      %p240 = scmp.ne.s32.totalorder %s228, %s229
      %p241 = scmp.eq.s32.totalorder %s25, 1
      %p242 = por %p240, %p241
      %p244 = scmp.ne.s32.totalorder %s229, %s243
      %p245 = scmp.eq.s32.totalorder %s25, 0
      %p246 = por %p244, %p245
      %s247 = ssub.s32 %s19, %s26
      %p248 = scmp.eq.s32.totalorder %s247, 0
      %s250 = sadd.s32 %s249, 1
      %s251 = scalar_select %p248, %s249, %s250
      %p254 = pneg %p248
      %p255 = scmp.eq.s32.totalorder %s19, 1
      %p256 = por %p254, %p255
      %p257 = scmp.ne.s32.totalorder %s249, %s252
      %p258 = scmp.eq.s32.totalorder %s19, 0
      %p259 = por %p257, %p258
      %p260 = scmp.ne.s32.totalorder %s249, %s252
      %p261 = scmp.eq.s32.totalorder %s24, 1
      %p262 = por %p260, %p261
      %p263 = scmp.ne.s32.totalorder %s252, %s253
      %p264 = scmp.eq.s32.totalorder %s24, 0
      %p265 = por %p263, %p264
      %p266 = scmp.ne.s32.totalorder %s252, %s253
      %p267 = scmp.eq.s32.totalorder %s25, 1
      %p268 = por %p266, %p267
      %p270 = scmp.ne.s32.totalorder %s253, %s269
      %p271 = scmp.eq.s32.totalorder %s25, 0
      %p272 = por %p270, %p271
      %p273 = scmp.le.s32.totalorder 1, %s19
      %p274 = scmp.lt.s32.totalorder %s19, 3
      %p275 = pnand %p273, %p274
      %p276 = pneg %p275
      // Predicated region
      $region9: #{tpu_custom_call.1} parent=5 // pred_check
        _
      $region10: #{tpu_custom_call.1} parent=5 // pred_check_branch
        %278 = sbr.rel (%p275) target = $region12
      $region11: #{tpu_custom_call.1} parent=5 // pred_region
        %s279 = ssub.s32 %s19, 1
        // Predicated region
        $region13: #{tpu_custom_call.1} parent=11 // pred_check
          %p280 = pneg %p92
        $region14: #{tpu_custom_call.1} parent=11 // pred_check_branch
          %282 = sbr.rel (%p280) target = $region16
        $region15: #{tpu_custom_call.1} parent=11 // pred_region
          _
        $region16: #{tpu_custom_call.1} parent=11 // pred_fallthru
          _
        // Predicated region
        $region17: #{tpu_custom_call.1} parent=11 // pred_check
          %p283 = pneg %p113
        $region18: #{tpu_custom_call.1} parent=11 // pred_check_branch
          %285 = sbr.rel (%p283) target = $region20
        $region19: #{tpu_custom_call.1} parent=11 // pred_region
          _
        $region20: #{tpu_custom_call.1} parent=11 // pred_fallthru
          _
        // Predicated region
        $region21: #{tpu_custom_call.1} parent=11 // pred_check
          %p286 = pneg %p134
        $region22: #{tpu_custom_call.1} parent=11 // pred_check_branch
          %288 = sbr.rel (%p286) target = $region24
        $region23: #{tpu_custom_call.1} parent=11 // pred_region
          _
        $region24: #{tpu_custom_call.1} parent=11 // pred_fallthru
          _
        // Predicated region
        $region25: #{tpu_custom_call.1} parent=11 // pred_check
          %p289 = pneg %p155
        $region26: #{tpu_custom_call.1} parent=11 // pred_check_branch
          %291 = sbr.rel (%p289) target = $region28
        $region27: #{tpu_custom_call.1} parent=11 // pred_region
          _
        $region28: #{tpu_custom_call.1} parent=11 // pred_fallthru
          _
        // Predicated region
        $region29: #{tpu_custom_call.1} parent=11 // pred_check
          %p292 = pneg %p176
        $region30: #{tpu_custom_call.1} parent=11 // pred_check_branch
          %294 = sbr.rel (%p292) target = $region32
        $region31: #{tpu_custom_call.1} parent=11 // pred_region
          _
        $region32: #{tpu_custom_call.1} parent=11 // pred_fallthru
          _
        // Predicated region
        $region33: #{tpu_custom_call.1} parent=11 // pred_check
          %p295 = pneg %p197
        $region34: #{tpu_custom_call.1} parent=11 // pred_check_branch
          %297 = sbr.rel (%p295) target = $region36
        $region35: #{tpu_custom_call.1} parent=11 // pred_region
          _
        $region36: #{tpu_custom_call.1} parent=11 // pred_fallthru
          _
        // Predicated region
        $region37: #{tpu_custom_call.1} parent=11 // pred_check
          %p298 = pneg %p218
        $region38: #{tpu_custom_call.1} parent=11 // pred_check_branch
          %300 = sbr.rel (%p298) target = $region40
        $region39: #{tpu_custom_call.1} parent=11 // pred_region
          _
        $region40: #{tpu_custom_call.1} parent=11 // pred_fallthru
          _
        // Predicated region
        $region41: #{tpu_custom_call.1} parent=11 // pred_check
          %p301 = pneg %p239
        $region42: #{tpu_custom_call.1} parent=11 // pred_check_branch
          %303 = sbr.rel (%p301) target = $region44
        $region43: #{tpu_custom_call.1} parent=11 // pred_region
          _
        $region44: #{tpu_custom_call.1} parent=11 // pred_fallthru
          _
      $region12: #{tpu_custom_call.1} parent=5 // pred_fallthru
        _
      %p304 = scmp.lt.s32.totalorder %s19, 2
      // Predicated region
      $region45: #{tpu_custom_call.1} parent=5 // pred_check
        %p305 = pneg %p304
      $region46: #{tpu_custom_call.1} parent=5 // pred_check_branch
        %307 = sbr.rel (%p305) target = $region48
      $region47: #{tpu_custom_call.1} parent=5 // pred_region
        // Predicated region
        $region49: #{tpu_custom_call.1} parent=47 // pred_check
          %p308 = pneg %p39
        $region50: #{tpu_custom_call.1} parent=47 // pred_check_branch
          %310 = sbr.rel (%p308) target = $region52
        $region51: #{tpu_custom_call.1} parent=47 // pred_region
          %p311 = scmp.lt.s32.totalorder %s19, 1
          %s312 = scalar_select %p311, %s19, 1
          %s313 = smul.addr %s312, 2
          %s314 = smul.addr %s313, 4
          %s315 = scalar_lea.vmem %s0, %s314
        $region52: #{tpu_custom_call.1} parent=47 // pred_fallthru
          _
        // Predicated region
        $region53: #{tpu_custom_call.1} parent=47 // pred_check
          %p316 = pneg %p65
        $region54: #{tpu_custom_call.1} parent=47 // pred_check_branch
          %318 = sbr.rel (%p316) target = $region56
        $region55: #{tpu_custom_call.1} parent=47 // pred_region
          %p319 = scmp.lt.s32.totalorder %s19, 1
          %s320 = scalar_select %p319, %s19, 1
          %s321 = smul.addr %s320, 2
          %s322 = smul.addr %s321, 8
          %s323 = scalar_lea.vmem %s1, %s322
        $region56: #{tpu_custom_call.1} parent=47 // pred_fallthru
          _
      $region48: #{tpu_custom_call.1} parent=5 // pred_fallthru
        _
      %p324 = scmp.le.s32.totalorder 1, %s19
      %p325 = scmp.lt.s32.totalorder %s19, 3
      %p326 = pnand %p324, %p325
      %p327 = pneg %p326
      // Predicated region
      $region57: #{tpu_custom_call.1} parent=5 // pred_check
        _
      $region58: #{tpu_custom_call.1} parent=5 // pred_check_branch
        %329 = sbr.rel (%p326) target = $region60
      $region59: #{tpu_custom_call.1} parent=5 // pred_region
        %s330 = ssub.s32 %s19, 1
        %p331 = scmp.lt.s32.totalorder %s24, 1
        %s332 = scalar_select %p331, %s24, 1
        %s333 = smul.addr %s332, 2
        %s334 = smul.addr %s333, 4
        %s335 = scalar_lea.vmem %s0, %s334
        %p336 = pneg %p45
        %p337 = pneg %p42
        %p338 = scmp.lt.s32.totalorder %s24, 1
        %s339 = scalar_select %p338, %s24, 1
        %s340 = smul.addr %s339, 2
        %s341 = smul.addr %s340, 8
        %s342 = scalar_lea.vmem %s1, %s341
        %p343 = pneg %p71
        %p344 = pneg %p68
        %p345 = pneg %p92
        %p346 = pneg %p89
        %p347 = pneg %p113
        %p348 = pneg %p110
        %p349 = pneg %p134
        %p350 = pneg %p131
        %p351 = pneg %p155
        %p352 = pneg %p152
        %p353 = pneg %p176
        %p354 = pneg %p173
        %p355 = pneg %p197
        %p356 = pneg %p194
        %p357 = pneg %p218
        %p358 = pneg %p215
        %p359 = pneg %p239
        %p360 = pneg %p236
        %p361 = pneg %p265
        %p362 = pneg %p262
        %s363 = sand.u32 %s252, 1
        %s364 = scalar_lea.sflag [#allocation3], %s363
        %s365 = sand.u32 %s252, 1
        %s366 = smul.addr %s365, 8
        %s367 = scalar_lea.vmem [#allocation2], %s366
        %p368 = scmp.lt.s32.totalorder %s24, 1
        %s369 = scalar_select %p368, %s24, 1
        %s370 = smul.addr %s369, 2
        %s371 = smul.addr %s370, 4
        %s372 = scalar_lea.vmem %s0, %s371
        %p373 = scmp.lt.s32.totalorder %s24, 1
        %s374 = scalar_select %p373, %s24, 1
        %s375 = smul.addr %s374, 2
        %s376 = smul.addr %s375, 8
        %s377 = scalar_lea.vmem %s1, %s376
        %v379 = vld [vmem:[%s372] sm:$0xff]
        %v381 = vcombine.high %v379, %v379
        %v383 = vpack.c.bf16 %v379, %v379
        %v384 = vpack.c.bf16 %v381, %v381
        %v385 = vld [vmem:[%s377] sm:$0xff]
        %v386 = vld [vmem:[%s377 + $0x8] sm:$0xff]
        %v387 = vpack.c.bf16 %v386, %v385
        %v388 = vld [vmem:[%s2] sm:$0xf]
        %v389 = vld [vmem:[%s2 + $0x4] sm:$0xf]
        %v390 = vld [vmem:[%s2 + $0x8] sm:$0xf]
        %v391 = vld [vmem:[%s2 + $0xc] sm:$0xf]
        %v392 = vld [vmem:[%s2 + $0x10] sm:$0xf]
        %v393 = vld [vmem:[%s2 + $0x14] sm:$0xf]
        %v394 = vld [vmem:[%s2 + $0x18] sm:$0xf]
        %v395 = vld [vmem:[%s2 + $0x1c] sm:$0xf]
        %v396 = vld [vmem:[%s3] sm:$0xff]
        %v397 = vld [vmem:[%s3 + $0x8] sm:$0xff]
        %v398 = vld [vmem:[%s3 + $0x10] sm:$0xff]
        %v399 = vld [vmem:[%s3 + $0x18] sm:$0xff]
        %v400 = vld [vmem:[%s3 + $0x20] sm:$0xff]
        %v401 = vld [vmem:[%s3 + $0x28] sm:$0xff]
        %v402 = vld [vmem:[%s3 + $0x30] sm:$0xff]
        %v403 = vld [vmem:[%s3 + $0x38] sm:$0xff]
        %405 = vset.pattern.permute.xlu0 0
        %406 = vperm.xlu0 %405, %v396
        %v407 = vpop.permute.xlu0 %406
        %410 = vset.pattern.permute.xlu0 0
        %411 = vperm.xlu0 %410, %v397
        %v412 = vpop.permute.xlu0 %411
        %415 = vset.pattern.permute.xlu0 0
        %416 = vperm.xlu0 %415, %v398
        %v417 = vpop.permute.xlu0 %416
        %420 = vset.pattern.permute.xlu0 0
        %421 = vperm.xlu0 %420, %v399
        %v422 = vpop.permute.xlu0 %421
        %425 = vset.pattern.permute.xlu0 0
        %426 = vperm.xlu0 %425, %v400
        %v427 = vpop.permute.xlu0 %426
        %430 = vset.pattern.permute.xlu0 0
        %431 = vperm.xlu0 %430, %v401
        %v432 = vpop.permute.xlu0 %431
        %435 = vset.pattern.permute.xlu0 0
        %436 = vperm.xlu0 %435, %v402
        %v437 = vpop.permute.xlu0 %436
        %440 = vset.pattern.permute.xlu0 0
        %441 = vperm.xlu0 %440, %v403
        %v442 = vpop.permute.xlu0 %441
        %v452 = vunpack.c.l.b16 %v388
        %v453 = vunpack.c.l.b16 %v389
        %v454 = vunpack.c.l.b16 %v390
        %v455 = vunpack.c.l.b16 %v391
        %v456 = vunpack.c.l.b16 %v392
        %v457 = vunpack.c.l.b16 %v393
        %v458 = vunpack.c.l.b16 %v394
        %v459 = vunpack.c.l.b16 %v395
        %v460 = vpack.c.b16 %v453, %v452
        %v461 = vpack.c.b16 %v455, %v454
        %v462 = vpack.c.b16 %v457, %v456
        %v463 = vpack.c.b16 %v459, %v458
        %vm464 = vcmask 31744
        %v466 = vsel %vm464, %v460, 0
        %v469 = vsel %vm464, %v461, 0
        %v472 = vsel %vm464, %v462, 0
        %v475 = vsel %vm464, %v463, 0
        %vm477 = vcmask 1041408
        %v479 = vsel %vm477, %v383, 0
        %v482 = vsel %vm477, %v384, 0
        %484 = vmatprep.subr.bf16.mxu0 %v482
        %485 = vmatpush1.bf16.msra.mxu0 %v479
        %486 = vmatprep.subr.bf16.mxu0 0
        %487 = vmatpush1.bf16.msra.mxu0 0
        %488 = vmatprep.subr.bf16.mxu0 0
        %489 = vmatpush1.bf16.msra.mxu0 0
        %490 = vmatprep.subr.bf16.mxu0 0
        %491 = vmatpush1.bf16.msra.mxu0 0
        %492 = vmatprep.subr.bf16.mxu0 0
        %493 = vmatpush1.bf16.msra.mxu0 0
        %494 = vmatprep.subr.bf16.mxu0 0
        %495 = vmatpush1.bf16.msra.mxu0 0
        %496 = vmatprep.subr.bf16.mxu0 0
        %497 = vmatpush1.bf16.msra.mxu0 0
        %498 = vmatprep.subr.bf16.mxu0 0
        %499 = vmatpush1.bf16.msra.mxu0 0
        %500 = vmatprep.subr.bf16.mxu0 0
        %501 = vmatpush1.bf16.msra.mxu0 0
        %502 = vmatprep.subr.bf16.mxu0 0
        %503 = vmatpush1.bf16.msra.mxu0 0
        %504 = vmatprep.subr.bf16.mxu0 0
        %505 = vmatpush1.bf16.msra.mxu0 0
        %506 = vmatprep.subr.bf16.mxu0 0
        %507 = vmatpush1.bf16.msra.mxu0 0
        %508 = vmatprep.subr.bf16.mxu0 0
        %509 = vmatpush1.bf16.msra.mxu0 0
        %510 = vmatprep.subr.bf16.mxu0 0
        %511 = vmatpush1.bf16.msra.mxu0 0
        %512 = vmatprep.subr.bf16.mxu0 0
        %513 = vmatpush1.bf16.msra.mxu0 0
        %514 = vmatprep.subr.bf16.mxu0 0
        %515 = vmatpush1.bf16.msra.mxu0 0
        %516 = vmatprep.mubr.bf16.mxu0 0
        %517 = vmatmul.mubr.bf16.gmra.mrb[0].mxu0 %v466
        %v518 = vpop.f32.mrb[0].mxu0
        %v519 = vadd.f32 %v407, %v518
        %v520 = vpop.f32.mrb[0].mxu0
        %v521 = vadd.f32 %v407, %v520
        %v522 = vpop.f32.mrb[0].mxu0
        %v523 = vadd.f32 %v412, %v522
        %v524 = vpop.f32.mrb[0].mxu0
        %v525 = vadd.f32 %v412, %v524
        %526 = vmatprep.mubr.bf16.mxu0 0
        %527 = vmatmul.mubr.bf16.gmra.mrb[0].mxu0 %v469
        %v528 = vpop.f32.mrb[0].mxu0
        %v529 = vadd.f32 %v417, %v528
        %v530 = vpop.f32.mrb[0].mxu0
        %v531 = vadd.f32 %v417, %v530
        %v532 = vpop.f32.mrb[0].mxu0
        %v533 = vadd.f32 %v422, %v532
        %v534 = vpop.f32.mrb[0].mxu0
        %v535 = vadd.f32 %v422, %v534
        %536 = vmatprep.mubr.bf16.mxu0 0
        %537 = vmatmul.mubr.bf16.gmra.mrb[0].mxu0 %v472
        %v538 = vpop.f32.mrb[0].mxu0
        %v539 = vadd.f32 %v427, %v538
        %v540 = vpop.f32.mrb[0].mxu0
        %v541 = vadd.f32 %v427, %v540
        %v542 = vpop.f32.mrb[0].mxu0
        %v543 = vadd.f32 %v432, %v542
        %v544 = vpop.f32.mrb[0].mxu0
        %v545 = vadd.f32 %v432, %v544
        %546 = vmatprep.mubr.bf16.mxu0 0
        %547 = vmatmul.mubr.bf16.gmra.mrb[0].mxu0 %v475
        %v548 = vpop.f32.mrb[0].mxu0
        %v549 = vadd.f32 %v437, %v548
        %v550 = vpop.f32.mrb[0].mxu0
        %v551 = vadd.f32 %v437, %v550
        %v552 = vpop.f32.mrb[0].mxu0
        %v553 = vadd.f32 %v442, %v552
        %v554 = vpop.f32.mrb[0].mxu0
        %v555 = vadd.f32 %v442, %v554
        %556 = vdwg.mxu0
        %v557 = vld [vmem:[%s4] sm:$0xf]
        %v558 = vld [vmem:[%s4 + $0x4] sm:$0xf]
        %v559 = vld [vmem:[%s4 + $0x8] sm:$0xf]
        %v560 = vld [vmem:[%s4 + $0xc] sm:$0xf]
        %v561 = vld [vmem:[%s4 + $0x10] sm:$0xf]
        %v562 = vld [vmem:[%s4 + $0x14] sm:$0xf]
        %v563 = vld [vmem:[%s4 + $0x18] sm:$0xf]
        %v564 = vld [vmem:[%s4 + $0x1c] sm:$0xf]
        %v565 = vld [vmem:[%s5] sm:$0xff]
        %v566 = vld [vmem:[%s5 + $0x8] sm:$0xff]
        %v567 = vld [vmem:[%s5 + $0x10] sm:$0xff]
        %v568 = vld [vmem:[%s5 + $0x18] sm:$0xff]
        %v569 = vld [vmem:[%s5 + $0x20] sm:$0xff]
        %v570 = vld [vmem:[%s5 + $0x28] sm:$0xff]
        %v571 = vld [vmem:[%s5 + $0x30] sm:$0xff]
        %v572 = vld [vmem:[%s5 + $0x38] sm:$0xff]
        %574 = vset.pattern.permute.xlu0 0
        %575 = vperm.xlu0 %574, %v565
        %v576 = vpop.permute.xlu0 %575
        %579 = vset.pattern.permute.xlu0 0
        %580 = vperm.xlu0 %579, %v566
        %v581 = vpop.permute.xlu0 %580
        %584 = vset.pattern.permute.xlu0 0
        %585 = vperm.xlu0 %584, %v567
        %v586 = vpop.permute.xlu0 %585
        %589 = vset.pattern.permute.xlu0 0
        %590 = vperm.xlu0 %589, %v568
        %v591 = vpop.permute.xlu0 %590
        %594 = vset.pattern.permute.xlu0 0
        %595 = vperm.xlu0 %594, %v569
        %v596 = vpop.permute.xlu0 %595
        %599 = vset.pattern.permute.xlu0 0
        %600 = vperm.xlu0 %599, %v570
        %v601 = vpop.permute.xlu0 %600
        %604 = vset.pattern.permute.xlu0 0
        %605 = vperm.xlu0 %604, %v571
        %v606 = vpop.permute.xlu0 %605
        %609 = vset.pattern.permute.xlu0 0
        %610 = vperm.xlu0 %609, %v572
        %v611 = vpop.permute.xlu0 %610
        %v621 = vunpack.c.l.b16 %v557
        %v622 = vunpack.c.l.b16 %v558
        %v623 = vunpack.c.l.b16 %v559
        %v624 = vunpack.c.l.b16 %v560
        %v625 = vunpack.c.l.b16 %v561
        %v626 = vunpack.c.l.b16 %v562
        %v627 = vunpack.c.l.b16 %v563
        %v628 = vunpack.c.l.b16 %v564
        %v629 = vpack.c.b16 %v622, %v621
        %v630 = vpack.c.b16 %v624, %v623
        %v631 = vpack.c.b16 %v626, %v625
        %v632 = vpack.c.b16 %v628, %v627
        %v634 = vsel %vm464, %v629, 0
        %v637 = vsel %vm464, %v630, 0
        %v640 = vsel %vm464, %v631, 0
        %v643 = vsel %vm464, %v632, 0
        %645 = vmatprep.subr.bf16.mxu0 %v482
        %646 = vmatpush1.bf16.msra.mxu0 %v479
        %647 = vmatprep.subr.bf16.mxu0 0
        %648 = vmatpush1.bf16.msra.mxu0 0
        %649 = vmatprep.subr.bf16.mxu0 0
        %650 = vmatpush1.bf16.msra.mxu0 0
        %651 = vmatprep.subr.bf16.mxu0 0
        %652 = vmatpush1.bf16.msra.mxu0 0
        %653 = vmatprep.subr.bf16.mxu0 0
        %654 = vmatpush1.bf16.msra.mxu0 0
        %655 = vmatprep.subr.bf16.mxu0 0
        %656 = vmatpush1.bf16.msra.mxu0 0
        %657 = vmatprep.subr.bf16.mxu0 0
        %658 = vmatpush1.bf16.msra.mxu0 0
        %659 = vmatprep.subr.bf16.mxu0 0
        %660 = vmatpush1.bf16.msra.mxu0 0
        %661 = vmatprep.subr.bf16.mxu0 0
        %662 = vmatpush1.bf16.msra.mxu0 0
        %663 = vmatprep.subr.bf16.mxu0 0
        %664 = vmatpush1.bf16.msra.mxu0 0
        %665 = vmatprep.subr.bf16.mxu0 0
        %666 = vmatpush1.bf16.msra.mxu0 0
        %667 = vmatprep.subr.bf16.mxu0 0
        %668 = vmatpush1.bf16.msra.mxu0 0
        %669 = vmatprep.subr.bf16.mxu0 0
        %670 = vmatpush1.bf16.msra.mxu0 0
        %671 = vmatprep.subr.bf16.mxu0 0
        %672 = vmatpush1.bf16.msra.mxu0 0
        %673 = vmatprep.subr.bf16.mxu0 0
        %674 = vmatpush1.bf16.msra.mxu0 0
        %675 = vmatprep.subr.bf16.mxu0 0
        %676 = vmatpush1.bf16.msra.mxu0 0
        %677 = vmatprep.mubr.bf16.mxu0 0
        %678 = vmatmul.mubr.bf16.gmra.mrb[0].mxu0 %v634
        %v679 = vpop.f32.mrb[0].mxu0
        %v680 = vadd.f32 %v576, %v679
        %v681 = vpop.f32.mrb[0].mxu0
        %v682 = vadd.f32 %v576, %v681
        %v683 = vpop.f32.mrb[0].mxu0
        %v684 = vadd.f32 %v581, %v683
        %v685 = vpop.f32.mrb[0].mxu0
        %v686 = vadd.f32 %v581, %v685
        %687 = vmatprep.mubr.bf16.mxu0 0
        %688 = vmatmul.mubr.bf16.gmra.mrb[0].mxu0 %v637
        %v689 = vpop.f32.mrb[0].mxu0
        %v690 = vadd.f32 %v586, %v689
        %v691 = vpop.f32.mrb[0].mxu0
        %v692 = vadd.f32 %v586, %v691
        %v693 = vpop.f32.mrb[0].mxu0
        %v694 = vadd.f32 %v591, %v693
        %v695 = vpop.f32.mrb[0].mxu0
        %v696 = vadd.f32 %v591, %v695
        %697 = vmatprep.mubr.bf16.mxu0 0
        %698 = vmatmul.mubr.bf16.gmra.mrb[0].mxu0 %v640
        %v699 = vpop.f32.mrb[0].mxu0
        %v700 = vadd.f32 %v596, %v699
        %v701 = vpop.f32.mrb[0].mxu0
        %v702 = vadd.f32 %v596, %v701
        %v703 = vpop.f32.mrb[0].mxu0
        %v704 = vadd.f32 %v601, %v703
        %v705 = vpop.f32.mrb[0].mxu0
        %v706 = vadd.f32 %v601, %v705
        %707 = vmatprep.mubr.bf16.mxu0 0
        %708 = vmatmul.mubr.bf16.gmra.mrb[0].mxu0 %v643
        %v709 = vpop.f32.mrb[0].mxu0
        %v710 = vadd.f32 %v606, %v709
        %v711 = vpop.f32.mrb[0].mxu0
        %v712 = vadd.f32 %v606, %v711
        %v713 = vpop.f32.mrb[0].mxu0
        %v714 = vadd.f32 %v611, %v713
        %v715 = vpop.f32.mrb[0].mxu0
        %v716 = vadd.f32 %v611, %v715
        %717 = vdwg.mxu0
        %v718 = vld [vmem:[%s6] sm:$0xf]
        %v719 = vld [vmem:[%s6 + $0x4] sm:$0xf]
        %v720 = vld [vmem:[%s6 + $0x8] sm:$0xf]
        %v721 = vld [vmem:[%s6 + $0xc] sm:$0xf]
        %v722 = vld [vmem:[%s6 + $0x10] sm:$0xf]
        %v723 = vld [vmem:[%s6 + $0x14] sm:$0xf]
        %v724 = vld [vmem:[%s6 + $0x18] sm:$0xf]
        %v725 = vld [vmem:[%s6 + $0x1c] sm:$0xf]
        %v734 = vunpack.c.l.b16 %v718
        %v735 = vunpack.c.l.b16 %v719
        %v736 = vunpack.c.l.b16 %v720
        %v737 = vunpack.c.l.b16 %v721
        %v738 = vunpack.c.l.b16 %v722
        %v739 = vunpack.c.l.b16 %v723
        %v740 = vunpack.c.l.b16 %v724
        %v741 = vunpack.c.l.b16 %v725
        %v742 = vpack.c.b16 %v735, %v734
        %v743 = vpack.c.b16 %v737, %v736
        %v744 = vpack.c.b16 %v739, %v738
        %v745 = vpack.c.b16 %v741, %v740
        %750 = vxpose.xlu0.c.b16.start [1/8] %v742, 128
        %751 = vxpose.xlu0.c.b16.cont [2/8] %v743, 128
        %752 = vxpose.xlu0.c.b16.cont [3/8] %v744, 128
        %753 = vxpose.xlu0.c.b16.cont [4/8] %v745, 128
        %754 = vxpose.xlu0.c.b16.cont [5/8] 0, 128
        %755 = vxpose.xlu0.c.b16.cont [6/8] 0, 128
        %756 = vxpose.xlu0.c.b16.cont [7/8] 0, 128
        %757 = vxpose.xlu0.c.b16.end [8/8] 0, 128
        %v758 = vpop.trf.xlu0
        %v759 = vpop.trf.xlu0
        %v760 = vpop.trf.xlu0
        %v761 = vpop.trf.xlu0
        %v762 = vpop.trf.xlu0
        %v763 = vpop.trf.xlu0
        %v764 = vpop.trf.xlu0
        %v765 = vpop.trf.xlu0
        %vm766 = vcmask 523264
        %v768 = vsel %vm766, %v758, 0
        %v771 = vsel %vm766, %v759, 0
        %v774 = vsel %vm766, %v760, 0
        %v777 = vsel %vm766, %v761, 0
        %v780 = vsel %vm766, %v762, 0
        %v783 = vsel %vm766, %v763, 0
        %v786 = vsel %vm766, %v764, 0
        %v789 = vsel %vm766, %v765, 0
        %v792 = vsel %vm766, %v387, 0
        %794 = vmatprep.subr.bf16.mxu0 0
        %795 = vmatpush1.bf16.xpose.msra.mxu0 %v792
        %796 = vmatprep.subr.bf16.mxu0 0
        %797 = vmatpush1.bf16.xpose.msra.mxu0 0
        %798 = vmatprep.subr.bf16.mxu0 0
        %799 = vmatpush1.bf16.xpose.msra.mxu0 0
        %800 = vmatprep.subr.bf16.mxu0 0
        %801 = vmatpush1.bf16.xpose.msra.mxu0 0
        %802 = vmatprep.subr.bf16.mxu0 0
        %803 = vmatpush1.bf16.xpose.msra.mxu0 0
        %804 = vmatprep.subr.bf16.mxu0 0
        %805 = vmatpush1.bf16.xpose.msra.mxu0 0
        %806 = vmatprep.subr.bf16.mxu0 0
        %807 = vmatpush1.bf16.xpose.msra.mxu0 0
        %808 = vmatprep.subr.bf16.mxu0 0
        %809 = vmatpush1.bf16.xpose.msra.mxu0 0
        %810 = vmatprep.subr.bf16.mxu0 0
        %811 = vmatpush1.bf16.xpose.msra.mxu0 0
        %812 = vmatprep.subr.bf16.mxu0 0
        %813 = vmatpush1.bf16.xpose.msra.mxu0 0
        %814 = vmatprep.subr.bf16.mxu0 0
        %815 = vmatpush1.bf16.xpose.msra.mxu0 0
        %816 = vmatprep.subr.bf16.mxu0 0
        %817 = vmatpush1.bf16.xpose.msra.mxu0 0
        %818 = vmatprep.subr.bf16.mxu0 0
        %819 = vmatpush1.bf16.xpose.msra.mxu0 0
        %820 = vmatprep.subr.bf16.mxu0 0
        %821 = vmatpush1.bf16.xpose.msra.mxu0 0
        %822 = vmatprep.subr.bf16.mxu0 0
        %823 = vmatpush1.bf16.xpose.msra.mxu0 0
        %824 = vmatprep.subr.bf16.mxu0 0
        %825 = vmatpush1.bf16.xpose.msra.mxu0 0
        %826 = vmatprep.mubr.bf16.mxu0 0
        %827 = vmatmul.mubr.bf16.gmra.mrb[0].mxu0 %v768
        %v828 = vpop.f32.mrb[0].mxu0
        %v829 = vadd.f32 0.0, %v828
        %v830 = vpop.f32.mrb[0].mxu0
        %v831 = vpop.f32.mrb[0].mxu0
        %v832 = vadd.f32 0.0, %v831
        %v833 = vpop.f32.mrb[0].mxu0
        %834 = vmatprep.mubr.bf16.mxu0 0
        %835 = vmatmul.mubr.bf16.gmra.mrb[0].mxu0 %v771
        %v836 = vpop.f32.mrb[0].mxu0
        %v837 = vadd.f32 0.0, %v836
        %v838 = vpop.f32.mrb[0].mxu0
        %v839 = vpop.f32.mrb[0].mxu0
        %v840 = vadd.f32 0.0, %v839
        %v841 = vpop.f32.mrb[0].mxu0
        %842 = vmatprep.mubr.bf16.mxu0 0
        %843 = vmatmul.mubr.bf16.gmra.mrb[0].mxu0 %v774
        %v844 = vpop.f32.mrb[0].mxu0
        %v845 = vadd.f32 0.0, %v844
        %v846 = vpop.f32.mrb[0].mxu0
        %v847 = vpop.f32.mrb[0].mxu0
        %v848 = vadd.f32 0.0, %v847
        %v849 = vpop.f32.mrb[0].mxu0
        %850 = vmatprep.mubr.bf16.mxu0 0
        %851 = vmatmul.mubr.bf16.gmra.mrb[0].mxu0 %v777
        %v852 = vpop.f32.mrb[0].mxu0
        %v853 = vadd.f32 0.0, %v852
        %v854 = vpop.f32.mrb[0].mxu0
        %v855 = vpop.f32.mrb[0].mxu0
        %v856 = vadd.f32 0.0, %v855
        %v857 = vpop.f32.mrb[0].mxu0
        %858 = vmatprep.mubr.bf16.mxu0 0
        %859 = vmatmul.mubr.bf16.gmra.mrb[0].mxu0 %v780
        %v860 = vpop.f32.mrb[0].mxu0
        %v861 = vadd.f32 0.0, %v860
        %v862 = vpop.f32.mrb[0].mxu0
        %v863 = vpop.f32.mrb[0].mxu0
        %v864 = vadd.f32 0.0, %v863
        %v865 = vpop.f32.mrb[0].mxu0
        %866 = vmatprep.mubr.bf16.mxu0 0
        %867 = vmatmul.mubr.bf16.gmra.mrb[0].mxu0 %v783
        %v868 = vpop.f32.mrb[0].mxu0
        %v869 = vadd.f32 0.0, %v868
        %v870 = vpop.f32.mrb[0].mxu0
        %v871 = vpop.f32.mrb[0].mxu0
        %v872 = vadd.f32 0.0, %v871
        %v873 = vpop.f32.mrb[0].mxu0
        %874 = vmatprep.mubr.bf16.mxu0 0
        %875 = vmatmul.mubr.bf16.gmra.mrb[0].mxu0 %v786
        %v876 = vpop.f32.mrb[0].mxu0
        %v877 = vadd.f32 0.0, %v876
        %v878 = vpop.f32.mrb[0].mxu0
        %v879 = vpop.f32.mrb[0].mxu0
        %v880 = vadd.f32 0.0, %v879
        %v881 = vpop.f32.mrb[0].mxu0
        %882 = vmatprep.mubr.bf16.mxu0 0
        %883 = vmatmul.mubr.bf16.gmra.mrb[0].mxu0 %v789
        %v884 = vpop.f32.mrb[0].mxu0
        %v885 = vadd.f32 0.0, %v884
        %v886 = vpop.f32.mrb[0].mxu0
        %v887 = vpop.f32.mrb[0].mxu0
        %v888 = vadd.f32 0.0, %v887
        %v889 = vpop.f32.mrb[0].mxu0
        %890 = vdwg.mxu0
        %v891 = vpack.c.bf16 %v832, %v829
        %v892 = vpack.c.bf16 %v840, %v837
        %v893 = vpack.c.bf16 %v848, %v845
        %v894 = vpack.c.bf16 %v856, %v853
        %v895 = vpack.c.bf16 %v864, %v861
        %v896 = vpack.c.bf16 %v872, %v869
        %v897 = vpack.c.bf16 %v880, %v877
        %v898 = vpack.c.bf16 %v888, %v885
        %v899 = vpack.c.bf16 %v684, %v680
        %v900 = vpack.c.bf16 %v686, %v682
        %v901 = vpack.c.bf16 %v694, %v690
        %v902 = vpack.c.bf16 %v696, %v692
        %v903 = vpack.c.bf16 %v704, %v700
        %v904 = vpack.c.bf16 %v706, %v702
        %v905 = vpack.c.bf16 %v714, %v710
        %v906 = vpack.c.bf16 %v716, %v712
        %907 = vxpose.xlu0.c.b16.start [1/8] %v891, 128
        %908 = vxpose.xlu0.c.b16.cont [2/8] %v892, 128
        %909 = vxpose.xlu0.c.b16.cont [3/8] %v893, 128
        %910 = vxpose.xlu0.c.b16.cont [4/8] %v894, 128
        %911 = vxpose.xlu0.c.b16.cont [5/8] 0, 128
        %912 = vxpose.xlu0.c.b16.cont [6/8] 0, 128
        %913 = vxpose.xlu0.c.b16.cont [7/8] 0, 128
        %914 = vxpose.xlu0.c.b16.end [8/8] 0, 128
        %v915 = vpop.trf.xlu0
        %v916 = vpop.trf.xlu0
        %v917 = vpop.trf.xlu0
        %v918 = vpop.trf.xlu0
        %v919 = vpop.trf.xlu0
        %v920 = vpop.trf.xlu0
        %v921 = vpop.trf.xlu0
        %v922 = vpop.trf.xlu0
        %v924 = vsel %vm766, %v915, 0
        %926 = vmatprep.subr.bf16.mxu0 %v900
        %927 = vmatpush1.bf16.msra.mxu0 %v899
        %928 = vmatprep.subr.bf16.mxu0 %v902
        %929 = vmatpush1.bf16.msra.mxu0 %v901
        %930 = vmatprep.subr.bf16.mxu0 %v904
        %931 = vmatpush1.bf16.msra.mxu0 %v903
        %932 = vmatprep.subr.bf16.mxu0 %v906
        %933 = vmatpush1.bf16.msra.mxu0 %v905
        %934 = vmatprep.subr.bf16.mxu0 0
        %935 = vmatpush1.bf16.msra.mxu0 0
        %936 = vmatprep.subr.bf16.mxu0 0
        %937 = vmatpush1.bf16.msra.mxu0 0
        %938 = vmatprep.subr.bf16.mxu0 0
        %939 = vmatpush1.bf16.msra.mxu0 0
        %940 = vmatprep.subr.bf16.mxu0 0
        %941 = vmatpush1.bf16.msra.mxu0 0
        %942 = vmatprep.subr.bf16.mxu0 0
        %943 = vmatpush1.bf16.msra.mxu0 0
        %944 = vmatprep.subr.bf16.mxu0 0
        %945 = vmatpush1.bf16.msra.mxu0 0
        %946 = vmatprep.subr.bf16.mxu0 0
        %947 = vmatpush1.bf16.msra.mxu0 0
        %948 = vmatprep.subr.bf16.mxu0 0
        %949 = vmatpush1.bf16.msra.mxu0 0
        %950 = vmatprep.subr.bf16.mxu0 0
        %951 = vmatpush1.bf16.msra.mxu0 0
        %952 = vmatprep.subr.bf16.mxu0 0
        %953 = vmatpush1.bf16.msra.mxu0 0
        %954 = vmatprep.subr.bf16.mxu0 0
        %955 = vmatpush1.bf16.msra.mxu0 0
        %956 = vmatprep.subr.bf16.mxu0 0
        %957 = vmatpush1.bf16.msra.mxu0 0
        %958 = vmatprep.mubr.bf16.mxu0 0
        %959 = vmatmul.mubr.bf16.gmra.mrb[0].mxu0 %v924
        %v960 = vpop.f32.mrb[0].mxu0
        %v961 = vadd.f32 0.0, %v960
        %v962 = vpop.f32.mrb[0].mxu0
        %v963 = vadd.f32 0.0, %v962
        %v964 = vpop.f32.mrb[0].mxu0
        %v965 = vadd.f32 0.0, %v964
        %v966 = vpop.f32.mrb[0].mxu0
        %v967 = vadd.f32 0.0, %v966
        %968 = vdwg.mxu0
        %v969 = vmax.f32 %v961, %v965
        %v970 = vrot.slane %v969, 4
        %v971 = vmax.f32 %v969, %v970
        %v972 = vrot.slane %v971, 2
        %v973 = vmax.f32 %v971, %v972
        %v974 = vrot.slane %v973, 1
        %v975 = vmax.f32 %v973, %v974
        %v976 = vmax.f32 %v963, %v967
        %v977 = vrot.slane %v976, 4
        %v978 = vmax.f32 %v976, %v977
        %v979 = vrot.slane %v978, 2
        %v980 = vmax.f32 %v978, %v979
        %v981 = vrot.slane %v980, 1
        %v982 = vmax.f32 %v980, %v981
        %v983 = vsub.f32 %v961, %v975
        %v984 = vsub.f32 %v963, %v982
        %v985 = vsub.f32 %v965, %v975
        %v986 = vsub.f32 %v967, %v982
        %v987 = vmul.f32 %v983, 1.442695
        %v988 = vpow.pop %v987
        %v989 = vmul.f32 %v984, 1.442695
        %v990 = vpow.pop %v989
        %v991 = vmul.f32 %v985, 1.442695
        %v992 = vpow.pop %v991
        %v993 = vmul.f32 %v986, 1.442695
        %v994 = vpow.pop %v993
        %v995 = vadd.f32 %v988, %v992
        %v996 = vrot.slane %v995, 4
        %v997 = vadd.f32 %v995, %v996
        %v998 = vrot.slane %v997, 2
        %v999 = vadd.f32 %v997, %v998
        %v1000 = vrot.slane %v999, 1
        %v1001 = vadd.f32 %v999, %v1000
        %v1002 = vadd.f32 %v990, %v994
        %v1003 = vrot.slane %v1002, 4
        %v1004 = vadd.f32 %v1002, %v1003
        %v1005 = vrot.slane %v1004, 2
        %v1006 = vadd.f32 %v1004, %v1005
        %v1007 = vrot.slane %v1006, 1
        %v1008 = vadd.f32 %v1006, %v1007
        %v1009 = vrcp.pop %v1001
        %v1010 = vrcp.pop %v1008
        %v1011 = vmul.f32 %v988, %v1009
        %v1012 = vmul.f32 %v990, %v1010
        %v1013 = vmul.f32 %v992, %v1009
        %v1014 = vmul.f32 %v994, %v1010
        %v1015 = vpack.c.bf16 %v1013, %v1011
        %v1016 = vpack.c.bf16 %v1014, %v1012
        %vm1017 = vcmask 130048
        %v1019 = vsel %vm1017, %v895, 0
        %v1022 = vsel %vm1017, %v896, 0
        %v1025 = vsel %vm1017, %v897, 0
        %v1028 = vsel %vm1017, %v898, 0
        %1030 = vmatprep.subr.bf16.mxu0 %v1016
        %1031 = vmatpush1.bf16.msra.mxu0 %v1015
        %1032 = vmatprep.subr.bf16.mxu0 0
        %1033 = vmatpush1.bf16.msra.mxu0 0
        %1034 = vmatprep.subr.bf16.mxu0 0
        %1035 = vmatpush1.bf16.msra.mxu0 0
        %1036 = vmatprep.subr.bf16.mxu0 0
        %1037 = vmatpush1.bf16.msra.mxu0 0
        %1038 = vmatprep.subr.bf16.mxu0 0
        %1039 = vmatpush1.bf16.msra.mxu0 0
        %1040 = vmatprep.subr.bf16.mxu0 0
        %1041 = vmatpush1.bf16.msra.mxu0 0
        %1042 = vmatprep.subr.bf16.mxu0 0
        %1043 = vmatpush1.bf16.msra.mxu0 0
        %1044 = vmatprep.subr.bf16.mxu0 0
        %1045 = vmatpush1.bf16.msra.mxu0 0
        %1046 = vmatprep.subr.bf16.mxu0 0
        %1047 = vmatpush1.bf16.msra.mxu0 0
        %1048 = vmatprep.subr.bf16.mxu0 0
        %1049 = vmatpush1.bf16.msra.mxu0 0
        %1050 = vmatprep.subr.bf16.mxu0 0
        %1051 = vmatpush1.bf16.msra.mxu0 0
        %1052 = vmatprep.subr.bf16.mxu0 0
        %1053 = vmatpush1.bf16.msra.mxu0 0
        %1054 = vmatprep.subr.bf16.mxu0 0
        %1055 = vmatpush1.bf16.msra.mxu0 0
        %1056 = vmatprep.subr.bf16.mxu0 0
        %1057 = vmatpush1.bf16.msra.mxu0 0
        %1058 = vmatprep.subr.bf16.mxu0 0
        %1059 = vmatpush1.bf16.msra.mxu0 0
        %1060 = vmatprep.subr.bf16.mxu0 0
        %1061 = vmatpush1.bf16.msra.mxu0 0
        %1062 = vmatprep.mubr.bf16.mxu0 0
        %1063 = vmatmul.mubr.bf16.gmra.mrb[0].mxu0 %v1019
        %v1064 = vpop.f32.mrb[0].mxu0
        %v1065 = vadd.f32 0.0, %v1064
        %v1066 = vpop.f32.mrb[0].mxu0
        %v1067 = vadd.f32 0.0, %v1066
        %v1068 = vpop.f32.mrb[0].mxu0
        %v1069 = vadd.f32 0.0, %v1068
        %v1070 = vpop.f32.mrb[0].mxu0
        %v1071 = vadd.f32 0.0, %v1070
        %1072 = vmatprep.mubr.bf16.mxu0 0
        %1073 = vmatmul.mubr.bf16.gmra.mrb[0].mxu0 %v1022
        %v1074 = vpop.f32.mrb[0].mxu0
        %v1075 = vadd.f32 0.0, %v1074
        %v1076 = vpop.f32.mrb[0].mxu0
        %v1077 = vadd.f32 0.0, %v1076
        %v1078 = vpop.f32.mrb[0].mxu0
        %v1079 = vadd.f32 0.0, %v1078
        %v1080 = vpop.f32.mrb[0].mxu0
        %v1081 = vadd.f32 0.0, %v1080
        %1082 = vmatprep.mubr.bf16.mxu0 0
        %1083 = vmatmul.mubr.bf16.gmra.mrb[0].mxu0 %v1025
        %v1084 = vpop.f32.mrb[0].mxu0
        %v1085 = vadd.f32 0.0, %v1084
        %v1086 = vpop.f32.mrb[0].mxu0
        %v1087 = vadd.f32 0.0, %v1086
        %v1088 = vpop.f32.mrb[0].mxu0
        %v1089 = vadd.f32 0.0, %v1088
        %v1090 = vpop.f32.mrb[0].mxu0
        %v1091 = vadd.f32 0.0, %v1090
        %1092 = vmatprep.mubr.bf16.mxu0 0
        %1093 = vmatmul.mubr.bf16.gmra.mrb[0].mxu0 %v1028
        %v1094 = vpop.f32.mrb[0].mxu0
        %v1095 = vadd.f32 0.0, %v1094
        %v1096 = vpop.f32.mrb[0].mxu0
        %v1097 = vadd.f32 0.0, %v1096
        %v1098 = vpop.f32.mrb[0].mxu0
        %v1099 = vadd.f32 0.0, %v1098
        %v1100 = vpop.f32.mrb[0].mxu0
        %v1101 = vadd.f32 0.0, %v1100
        %1102 = vdwg.mxu0
        %v1103 = vld [vmem:[%s7] sm:$0xf]
        %v1104 = vld [vmem:[%s7 + $0x4] sm:$0xf]
        %v1105 = vld [vmem:[%s7 + $0x8] sm:$0xf]
        %v1106 = vld [vmem:[%s7 + $0xc] sm:$0xf]
        %v1107 = vld [vmem:[%s7 + $0x10] sm:$0xf]
        %v1108 = vld [vmem:[%s7 + $0x14] sm:$0xf]
        %v1109 = vld [vmem:[%s7 + $0x18] sm:$0xf]
        %v1110 = vld [vmem:[%s7 + $0x1c] sm:$0xf]
        %v1111 = vpack.c.bf16 %v1069, %v1065
        %v1112 = vpack.c.bf16 %v1071, %v1067
        %v1113 = vpack.c.bf16 %v1079, %v1075
        %v1114 = vpack.c.bf16 %v1081, %v1077
        %v1115 = vpack.c.bf16 %v1089, %v1085
        %v1116 = vpack.c.bf16 %v1091, %v1087
        %v1117 = vpack.c.bf16 %v1099, %v1095
        %v1118 = vpack.c.bf16 %v1101, %v1097
        %v1127 = vunpack.c.l.b16 %v1103
        %v1128 = vunpack.c.l.b16 %v1104
        %v1129 = vunpack.c.l.b16 %v1105
        %v1130 = vunpack.c.l.b16 %v1106
        %v1131 = vunpack.c.l.b16 %v1107
        %v1132 = vunpack.c.l.b16 %v1108
        %v1133 = vunpack.c.l.b16 %v1109
        %v1134 = vunpack.c.l.b16 %v1110
        %v1135 = vpack.c.b16 %v1128, %v1127
        %v1136 = vpack.c.b16 %v1130, %v1129
        %v1137 = vpack.c.b16 %v1132, %v1131
        %v1138 = vpack.c.b16 %v1134, %v1133
        %v1140 = vsel %vm766, %v1135, 0
        %v1143 = vsel %vm766, %v1136, 0
        %v1146 = vsel %vm766, %v1137, 0
        %v1149 = vsel %vm766, %v1138, 0
        %1151 = vmatprep.subr.bf16.mxu0 %v1112
        %1152 = vmatpush1.bf16.msra.mxu0 %v1111
        %1153 = vmatprep.subr.bf16.mxu0 %v1114
        %1154 = vmatpush1.bf16.msra.mxu0 %v1113
        %1155 = vmatprep.subr.bf16.mxu0 %v1116
        %1156 = vmatpush1.bf16.msra.mxu0 %v1115
        %1157 = vmatprep.subr.bf16.mxu0 %v1118
        %1158 = vmatpush1.bf16.msra.mxu0 %v1117
        %1159 = vmatprep.subr.bf16.mxu0 0
        %1160 = vmatpush1.bf16.msra.mxu0 0
        %1161 = vmatprep.subr.bf16.mxu0 0
        %1162 = vmatpush1.bf16.msra.mxu0 0
        %1163 = vmatprep.subr.bf16.mxu0 0
        %1164 = vmatpush1.bf16.msra.mxu0 0
        %1165 = vmatprep.subr.bf16.mxu0 0
        %1166 = vmatpush1.bf16.msra.mxu0 0
        %1167 = vmatprep.subr.bf16.mxu0 0
        %1168 = vmatpush1.bf16.msra.mxu0 0
        %1169 = vmatprep.subr.bf16.mxu0 0
        %1170 = vmatpush1.bf16.msra.mxu0 0
        %1171 = vmatprep.subr.bf16.mxu0 0
        %1172 = vmatpush1.bf16.msra.mxu0 0
        %1173 = vmatprep.subr.bf16.mxu0 0
        %1174 = vmatpush1.bf16.msra.mxu0 0
        %1175 = vmatprep.subr.bf16.mxu0 0
        %1176 = vmatpush1.bf16.msra.mxu0 0
        %1177 = vmatprep.subr.bf16.mxu0 0
        %1178 = vmatpush1.bf16.msra.mxu0 0
        %1179 = vmatprep.subr.bf16.mxu0 0
        %1180 = vmatpush1.bf16.msra.mxu0 0
        %1181 = vmatprep.subr.bf16.mxu0 0
        %1182 = vmatpush1.bf16.msra.mxu0 0
        %1183 = vmatprep.mubr.bf16.mxu0 0
        %1184 = vmatmul.mubr.bf16.gmra.mrb[0].mxu0 %v1140
        %v1185 = vpop.f32.mrb[0].mxu0
        %v1186 = vadd.f32 %v519, %v1185
        %v1187 = vpop.f32.mrb[0].mxu0
        %v1188 = vadd.f32 %v521, %v1187
        %v1189 = vpop.f32.mrb[0].mxu0
        %v1190 = vadd.f32 %v523, %v1189
        %v1191 = vpop.f32.mrb[0].mxu0
        %v1192 = vadd.f32 %v525, %v1191
        %1193 = vmatprep.mubr.bf16.mxu0 0
        %1194 = vmatmul.mubr.bf16.gmra.mrb[0].mxu0 %v1143
        %v1195 = vpop.f32.mrb[0].mxu0
        %v1196 = vadd.f32 %v529, %v1195
        %v1197 = vpop.f32.mrb[0].mxu0
        %v1198 = vadd.f32 %v531, %v1197
        %v1199 = vpop.f32.mrb[0].mxu0
        %v1200 = vadd.f32 %v533, %v1199
        %v1201 = vpop.f32.mrb[0].mxu0
        %v1202 = vadd.f32 %v535, %v1201
        %1203 = vmatprep.mubr.bf16.mxu0 0
        %1204 = vmatmul.mubr.bf16.gmra.mrb[0].mxu0 %v1146
        %v1205 = vpop.f32.mrb[0].mxu0
        %v1206 = vadd.f32 %v539, %v1205
        %v1207 = vpop.f32.mrb[0].mxu0
        %v1208 = vadd.f32 %v541, %v1207
        %v1209 = vpop.f32.mrb[0].mxu0
        %v1210 = vadd.f32 %v543, %v1209
        %v1211 = vpop.f32.mrb[0].mxu0
        %v1212 = vadd.f32 %v545, %v1211
        %1213 = vmatprep.mubr.bf16.mxu0 0
        %1214 = vmatmul.mubr.bf16.gmra.mrb[0].mxu0 %v1149
        %v1215 = vpop.f32.mrb[0].mxu0
        %v1216 = vadd.f32 %v549, %v1215
        %v1217 = vpop.f32.mrb[0].mxu0
        %v1218 = vadd.f32 %v551, %v1217
        %v1219 = vpop.f32.mrb[0].mxu0
        %v1220 = vadd.f32 %v553, %v1219
        %v1221 = vpop.f32.mrb[0].mxu0
        %v1222 = vadd.f32 %v555, %v1221
        %1223 = vdwg.mxu0
        %v1224 = vld [vmem:[%s8] sm:$0x3]
        %v1225 = vpack.c.bf16 %v1190, %v1186
        %v1226 = vpack.c.bf16 %v1192, %v1188
        %v1227 = vpack.c.bf16 %v1200, %v1196
        %v1228 = vpack.c.bf16 %v1202, %v1198
        %v1229 = vpack.c.bf16 %v1210, %v1206
        %v1230 = vpack.c.bf16 %v1212, %v1208
        %v1231 = vpack.c.bf16 %v1220, %v1216
        %v1232 = vpack.c.bf16 %v1222, %v1218
        %v1233 = vld [vmem:[%s9] sm:$0xf]
        %1235 = vset.pattern.permute.xlu0 0
        %1236 = vperm.xlu0 %1235, %v1233
        %v1237 = vpop.permute.xlu0 %1236
        %v1240 = vsel %vm766, %v1224, 0
        %1242 = vmatprep.subr.bf16.mxu0 %v1226
        %1243 = vmatpush1.bf16.msra.mxu0 %v1225
        %1244 = vmatprep.subr.bf16.mxu0 %v1228
        %1245 = vmatpush1.bf16.msra.mxu0 %v1227
        %1246 = vmatprep.subr.bf16.mxu0 %v1230
        %1247 = vmatpush1.bf16.msra.mxu0 %v1229
        %1248 = vmatprep.subr.bf16.mxu0 %v1232
        %1249 = vmatpush1.bf16.msra.mxu0 %v1231
        %1250 = vmatprep.subr.bf16.mxu0 0
        %1251 = vmatpush1.bf16.msra.mxu0 0
        %1252 = vmatprep.subr.bf16.mxu0 0
        %1253 = vmatpush1.bf16.msra.mxu0 0
        %1254 = vmatprep.subr.bf16.mxu0 0
        %1255 = vmatpush1.bf16.msra.mxu0 0
        %1256 = vmatprep.subr.bf16.mxu0 0
        %1257 = vmatpush1.bf16.msra.mxu0 0
        %1258 = vmatprep.subr.bf16.mxu0 0
        %1259 = vmatpush1.bf16.msra.mxu0 0
        %1260 = vmatprep.subr.bf16.mxu0 0
        %1261 = vmatpush1.bf16.msra.mxu0 0
        %1262 = vmatprep.subr.bf16.mxu0 0
        %1263 = vmatpush1.bf16.msra.mxu0 0
        %1264 = vmatprep.subr.bf16.mxu0 0
        %1265 = vmatpush1.bf16.msra.mxu0 0
        %1266 = vmatprep.subr.bf16.mxu0 0
        %1267 = vmatpush1.bf16.msra.mxu0 0
        %1268 = vmatprep.subr.bf16.mxu0 0
        %1269 = vmatpush1.bf16.msra.mxu0 0
        %1270 = vmatprep.subr.bf16.mxu0 0
        %1271 = vmatpush1.bf16.msra.mxu0 0
        %1272 = vmatprep.subr.bf16.mxu0 0
        %1273 = vmatpush1.bf16.msra.mxu0 0
        %1274 = vmatprep.mubr.bf16.mxu0 0
        %1275 = vmatmul.mubr.bf16.gmra.mrb[0].mxu0 %v1240
        %v1276 = vpop.f32.mrb[0].mxu0
        %v1277 = vadd.f32 %v1237, %v1276
        %v1278 = vpop.f32.mrb[0].mxu0
        %v1279 = vadd.f32 %v1237, %v1278
        %v1280 = vpop.f32.mrb[0].mxu0
        %v1281 = vpop.f32.mrb[0].mxu0
        %1282 = vdwg.mxu0
        %v1283 = vadd.f32 %v1277, %v379
        %v1284 = vadd.f32 %v1279, %v381
        %v1287 = vcombine.low %v1283, %v1284
        %1289 = vst [vmem:[%s367] sm:$0xff] %v1287
        %s1290 = sand.u32 %s252, 1
        %s1291 = scalar_lea.sflag [#allocation3], %s1290
        %s1292 = sand.u32 %s252, 1
        %s1293 = smul.addr %s1292, 8
        %s1294 = scalar_lea.vmem [#allocation2], %s1293
        // Predicated region
        $region61: #{tpu_custom_call.1} parent=59 // pred_check
          %p1295 = pneg %p262
        $region62: #{tpu_custom_call.1} parent=59 // pred_check_branch
          %1297 = sbr.rel (%p1295) target = $region64
        $region63: #{tpu_custom_call.1} parent=59 // pred_region
          %s1299 = ssub.s32 128, 128
          %1300 = vsyncadd %s1291, %s1299
          %s1301 = smul.addr %s24, 2
          %s1302 = smul.addr %s1301, 64
          %s1303 = scalar_lea.hbm %s10, %s1302
          %s1305 = sshll.u32 %s1294, 4
          %s1306 = int_to_ptr.vmem [resolvable:$true] %s1305
          %1308 = dma.vmem_to_hbm [thread:$0]  %s1306, 128, %s1303, %s1291
        $region64: #{tpu_custom_call.1} parent=59 // pred_fallthru
          _
      $region60: #{tpu_custom_call.1} parent=5 // pred_fallthru
        _
      %p1309 = scmp.le.s32.totalorder 2, %s19
      // Predicated region
      $region65: #{tpu_custom_call.1} parent=5 // pred_check
        %p1310 = pneg %p1309
      $region66: #{tpu_custom_call.1} parent=5 // pred_check_branch
        %1312 = sbr.rel (%p1310) target = $region68
      $region67: #{tpu_custom_call.1} parent=5 // pred_region
        %s1313 = ssub.s32 %s19, 2
        // Predicated region
        $region69: #{tpu_custom_call.1} parent=67 // pred_check
          %p1314 = pneg %p268
        $region70: #{tpu_custom_call.1} parent=67 // pred_check_branch
          %1316 = sbr.rel (%p1314) target = $region72
        $region71: #{tpu_custom_call.1} parent=67 // pred_region
          %s1317 = sand.u32 %s253, 1
          %s1318 = scalar_lea.sflag [#allocation3], %s1317
          %s1319 = sand.u32 %s253, 1
          %s1320 = smul.addr %s1319, 8
          %s1321 = scalar_lea.vmem [#allocation2], %s1320
          %1322 = dma.done %s1318, 128
        $region72: #{tpu_custom_call.1} parent=67 // pred_fallthru
          _
      $region68: #{tpu_custom_call.1} parent=5 // pred_fallthru
        _
    $region6: #{tpu_custom_call.1} parent=1 // loop_footer
      %s23 = sadd.s32 1, %s19
    $region7: #{tpu_custom_call.1} parent=1 // loop_footer_branch
      %18 = sbr.rel target = $region3
    $region8: #{tpu_custom_call.1} parent=1 // loop_exit
      _
    %1323 = vsyncpa [#allocation3], 1
    %s1324 = scalar_lea.sflag [#allocation3], 1
    %1325 = vsyncpa %s1324, 1

</llo_original>
